<compile_context>
chip_gen: v7x
topology: tpu7x:2x2x1
jax: 0.10.0
libtpu: 0.0.40
codegen_flags: <defaults>
</compile_context>

<pallas_src>
import functools

import jax
import jax.numpy as jnp
from jax.experimental import pallas as pl
from jax.experimental.pallas import tpu as pltpu

LN_EPS = 1e-5  # PyTorch nn.LayerNorm default


def _round_up(a: int, m: int) -> int:
    return (a + m - 1) // m * m


def _make_kernel(out_dim: int, out_dim_padded: int):
    """Kernel closed over the *true* feature width so the LayerNorm reduction
    ignores lane padding."""
    inv_n = 1.0 / float(out_dim)
    needs_mask = out_dim != out_dim_padded

    def kernel(x_ref, w1_ref, b1_ref, g_ref, bt_ref, w2_ref, b2_ref, o_ref):
        mxu_dtype = w1_ref.dtype  # bf16 when the wrapper pre-cast the weights

        # Linear 1 on the MXU, f32 accumulation.
        x = x_ref[...].astype(mxu_dtype)
        h = jnp.dot(x, w1_ref[...], preferred_element_type=jnp.float32)
        h = h + b1_ref[...]

        # LayerNorm over the true (unpadded) feature width, biased variance,
        # all in f32.  Padded columns of h are exactly 0 (zero-padded W1/b1),
        # so the sum for the mean is already correct; the centered term needs
        # an explicit mask.
        mu = jnp.sum(h, axis=-1, keepdims=True) * inv_n
        c = h - mu
        if needs_mask:
            col = jax.lax.broadcasted_iota(jnp.int32, (1, out_dim_padded), 1)
            c = c * jnp.where(col < out_dim, 1.0, 0.0)
        var = jnp.sum(c * c, axis=-1, keepdims=True) * inv_n
        hn = c * jax.lax.rsqrt(var + LN_EPS)
        hn = hn * g_ref[...] + bt_ref[...]

        # ReLU
        hn = jnp.maximum(hn, 0.0)

        # Linear 2 on the MXU, f32 accumulation.
        out = jnp.dot(hn.astype(mxu_dtype), w2_ref[...],
                      preferred_element_type=jnp.float32)
        out = out + b2_ref[...]
        o_ref[...] = out.astype(o_ref.dtype)

    return kernel


@functools.partial(jax.jit, static_argnames=("use_bf16_mxu", "tile_b"))
def mlp_forward(x, w1, b1, gamma, beta, w2, b2, *, use_bf16_mxu=True, tile_b=None):
    """x: (B, in_dim); w1: (in_dim, out_dim); w2: (out_dim, out_dim);
    b1/gamma/beta/b2: (out_dim,) or (1, out_dim).  Returns (B, out_dim)."""
    B, din = x.shape
    dout = w1.shape[1]

    # Lane-align the feature axes; keep the batch tile a multiple of 8 (f32).
    din_p = _round_up(din, 128)
    dout_p = _round_up(dout, 128)
    if tile_b is None:
        tile_b = min(256, _round_up(B, 8))
    b_p = _round_up(B, tile_b)

    f32 = jnp.float32
    xp = jnp.pad(x.astype(f32), ((0, b_p - B), (0, din_p - din)))
    w1p = jnp.pad(w1.astype(f32), ((0, din_p - din), (0, dout_p - dout)))
    w2p = jnp.pad(w2.astype(f32), ((0, dout_p - dout), (0, dout_p - dout)))
    b1p = jnp.pad(jnp.reshape(b1, (1, -1)).astype(f32), ((0, 0), (0, dout_p - dout)))
    gp = jnp.pad(jnp.reshape(gamma, (1, -1)).astype(f32), ((0, 0), (0, dout_p - dout)))
    btp = jnp.pad(jnp.reshape(beta, (1, -1)).astype(f32), ((0, 0), (0, dout_p - dout)))
    b2p = jnp.pad(jnp.reshape(b2, (1, -1)).astype(f32), ((0, 0), (0, dout_p - dout)))
    if use_bf16_mxu:
        # Weights fed to the MXU as bf16 (halves resident VMEM + HBM traffic);
        # accumulation and all elementwise math remain f32.
        w1p = w1p.astype(jnp.bfloat16)
        w2p = w2p.astype(jnp.bfloat16)

    grid = (b_p // tile_b,)
    kernel = _make_kernel(dout, dout_p)

    def resident(shape):
        return pl.BlockSpec(shape, lambda i: (0, 0))

    out_padded = pl.pallas_call(
        kernel,
        out_shape=jax.ShapeDtypeStruct((b_p, dout_p), x.dtype),
        grid=grid,
        in_specs=[
            pl.BlockSpec((tile_b, din_p), lambda i: (i, 0)),  # x tile (pipelined)
            resident((din_p, dout_p)),                        # w1
            resident((1, dout_p)),                            # b1
            resident((1, dout_p)),                            # gamma
            resident((1, dout_p)),                            # beta
            resident((dout_p, dout_p)),                       # w2
            resident((1, dout_p)),                            # b2
        ],
        out_specs=pl.BlockSpec((tile_b, dout_p), lambda i: (i, 0)),
        compiler_params=pltpu.CompilerParams(
            dimension_semantics=("parallel",),   # shard batch tiles on v7x's 2 TCs
            vmem_limit_bytes=32 * 1024 * 1024,   # safe on 64 MiB (v7x) and 128 MiB parts
        ),
    )(xp, w1p, b1p, gp, btp, w2p, b2p)

    return out_padded[:B, :dout]


def mlp_reference(x, w1, b1, gamma, beta, w2, b2, use_bf16_mxu=False):
    dt = jnp.bfloat16 if use_bf16_mxu else jnp.float32
    b1 = jnp.reshape(b1, (1, -1))
    b2 = jnp.reshape(b2, (1, -1))
    gamma = jnp.reshape(gamma, (1, -1))
    beta = jnp.reshape(beta, (1, -1))
    h = jnp.dot(x.astype(dt), w1.astype(dt), preferred_element_type=jnp.float32) + b1
    mu = h.mean(-1, keepdims=True)
    var = ((h - mu) ** 2).mean(-1, keepdims=True)
    hn = (h - mu) * jax.lax.rsqrt(var + LN_EPS) * gamma + beta
    hn = jnp.maximum(hn, 0.0)
    return jnp.dot(hn.astype(dt), w2.astype(dt), preferred_element_type=jnp.float32) + b2


if __name__ == "__main__":
    # Small shapes consistent with MLP.forward: x is (batch, input_dim).
    B, input_dim, output_dim = 8, 16, 32

    key = jax.random.PRNGKey(0)
    kx, k1, k2, k3, k4 = jax.random.split(key, 5)

    x = jax.random.normal(kx, (B, input_dim), dtype=jnp.float32)

    # PyTorch Linear weight is (out, in); we store the transposed (in, out)
    # form so the kernel computes x @ W directly.
    w1 = jax.random.normal(k1, (input_dim, output_dim), dtype=jnp.float32) * (1.0 / jnp.sqrt(input_dim))
    b1 = jax.random.normal(k2, (1, output_dim), dtype=jnp.float32) * 0.1
    gamma = jnp.ones((1, output_dim), dtype=jnp.float32)
    beta = jnp.zeros((1, output_dim), dtype=jnp.float32)
    w2 = jax.random.normal(k3, (output_dim, output_dim), dtype=jnp.float32) * (1.0 / jnp.sqrt(output_dim))
    b2 = jax.random.normal(k4, (1, output_dim), dtype=jnp.float32) * 0.1

    out = mlp_forward(x, w1, b1, gamma, beta, w2, b2)
    out = jax.block_until_ready(out)
    assert out.shape == (B, output_dim)

    # Exact-math check against a reference applying the same bf16 MXU casts.
    ref_matched = mlp_reference(x, w1, b1, gamma, beta, w2, b2, use_bf16_mxu=True)
    assert jnp.allclose(out, ref_matched, atol=2e-3, rtol=2e-3), "mismatch vs bf16-matched reference"

    # Sanity check against the full-f32 module semantics (loose tol for bf16 MXU inputs).
    ref_f32 = mlp_reference(x, w1, b1, gamma, beta, w2, b2, use_bf16_mxu=False)
    assert jnp.allclose(out, ref_f32, atol=5e-2, rtol=5e-2), "mismatch vs f32 reference"

    print("KERNEL_OK")
</pallas_src>

<mosaic_0001>
module attributes {stable_mosaic.version = 11 : i64} {
  func.func @kernel(%arg0: i32, %arg1: memref<8x128xf32, #tpu.memory_space<vmem>>, %arg2: memref<128x128xbf16, #tpu.memory_space<vmem>>, %arg3: memref<1x128xf32, #tpu.memory_space<vmem>>, %arg4: memref<1x128xf32, #tpu.memory_space<vmem>>, %arg5: memref<1x128xf32, #tpu.memory_space<vmem>>, %arg6: memref<128x128xbf16, #tpu.memory_space<vmem>>, %arg7: memref<1x128xf32, #tpu.memory_space<vmem>>, %arg8: memref<8x128xf32, #tpu.memory_space<vmem>>) attributes {dimension_semantics = [#tpu.dimension_semantics<parallel>], iteration_bounds = array<i64: 1>, scalar_prefetch = 0 : i64, scratch_operands = 0 : i64, tpu.core_type = #tpu.core_type<tc>, window_params = [{transform_indices = @transform_0, window_bounds = array<i64: 8, 128>}, {pipeline_mode = #tpu.pipeline_mode<synchronous>, transform_indices = @transform_1, window_bounds = array<i64: 128, 128>}, {pipeline_mode = #tpu.pipeline_mode<synchronous>, transform_indices = @transform_2, window_bounds = array<i64: 1, 128>}, {pipeline_mode = #tpu.pipeline_mode<synchronous>, transform_indices = @transform_3, window_bounds = array<i64: 1, 128>}, {pipeline_mode = #tpu.pipeline_mode<synchronous>, transform_indices = @transform_4, window_bounds = array<i64: 1, 128>}, {pipeline_mode = #tpu.pipeline_mode<synchronous>, transform_indices = @transform_5, window_bounds = array<i64: 128, 128>}, {pipeline_mode = #tpu.pipeline_mode<synchronous>, transform_indices = @transform_6, window_bounds = array<i64: 1, 128>}, {transform_indices = @transform_7, window_bounds = array<i64: 8, 128>}]} {
    %c0 = arith.constant 0 : index
    %c0_0 = arith.constant 0 : index
    %0 = vector.load %arg1[%c0, %c0_0] : memref<8x128xf32, #tpu.memory_space<vmem>>, vector<8x128xf32>
    %1 = arith.truncf %0 : vector<8x128xf32> to vector<8x128xbf16>
    %c0_1 = arith.constant 0 : index
    %c0_2 = arith.constant 0 : index
    %2 = vector.load %arg2[%c0_1, %c0_2] : memref<128x128xbf16, #tpu.memory_space<vmem>>, vector<128x128xbf16>
    %cst = arith.constant dense<0.000000e+00> : vector<8x128xf32>
    %3 = tpu.matmul %1, %2, %cst {dimension_numbers = #tpu.dot_dimension_numbers<[1], [0], [0], [1], [0, 0, 1, 1], [], []>} : vector<8x128xbf16>, vector<128x128xbf16>, vector<8x128xf32> -> vector<8x128xf32>
    %c0_3 = arith.constant 0 : index
    %c0_4 = arith.constant 0 : index
    %4 = vector.load %arg3[%c0_3, %c0_4] : memref<1x128xf32, #tpu.memory_space<vmem>>, vector<1x128xf32>
    %5 = vector.broadcast %4 : vector<1x128xf32> to vector<8x128xf32>
    %6 = arith.addf %3, %5 : vector<8x128xf32>
    %cst_5 = arith.constant dense<0.000000e+00> : vector<8xf32>
    %7 = vector.multi_reduction <add>, %6, %cst_5 [1] : vector<8x128xf32> to vector<8xf32>
    %8 = vector.shape_cast %7 : vector<8xf32> to vector<8x1xf32>
    %cst_6 = arith.constant 3.125000e-02 : f32
    %9 = vector.broadcast %cst_6 : f32 to vector<8x1xf32>
    %10 = arith.mulf %8, %9 : vector<8x1xf32>
    %11 = vector.broadcast %10 : vector<8x1xf32> to vector<8x128xf32>
    %12 = arith.subf %6, %11 : vector<8x128xf32>
    %13 = tpu.iota {dimensions = array<i32: 1>} : vector<1x128xi32>
    %c32_i32 = arith.constant 32 : i32
    %14 = vector.broadcast %c32_i32 : i32 to vector<1x128xi32>
    %15 = arith.cmpi slt, %13, %14 : vector<1x128xi32>
    %cst_7 = arith.constant 1.000000e+00 : f32
    %cst_8 = arith.constant 0.000000e+00 : f32
    %16 = vector.broadcast %cst_7 : f32 to vector<1x128xf32>
    %17 = vector.broadcast %cst_8 : f32 to vector<1x128xf32>
    %18 = arith.select %15, %16, %17 : vector<1x128xi1>, vector<1x128xf32>
    %19 = vector.broadcast %18 : vector<1x128xf32> to vector<8x128xf32>
    %20 = arith.mulf %12, %19 : vector<8x128xf32>
    %21 = arith.mulf %20, %20 : vector<8x128xf32>
    %cst_9 = arith.constant dense<0.000000e+00> : vector<8xf32>
    %22 = vector.multi_reduction <add>, %21, %cst_9 [1] : vector<8x128xf32> to vector<8xf32>
    %23 = vector.shape_cast %22 : vector<8xf32> to vector<8x1xf32>
    %cst_10 = arith.constant 3.125000e-02 : f32
    %24 = vector.broadcast %cst_10 : f32 to vector<8x1xf32>
    %25 = arith.mulf %23, %24 : vector<8x1xf32>
    %cst_11 = arith.constant 9.99999974E-6 : f32
    %26 = vector.broadcast %cst_11 : f32 to vector<8x1xf32>
    %27 = arith.addf %25, %26 : vector<8x1xf32>
    %28 = math.rsqrt %27 : vector<8x1xf32>
    %29 = vector.broadcast %28 : vector<8x1xf32> to vector<8x128xf32>
    %30 = arith.mulf %20, %29 : vector<8x128xf32>
    %c0_12 = arith.constant 0 : index
    %c0_13 = arith.constant 0 : index
    %31 = vector.load %arg4[%c0_12, %c0_13] : memref<1x128xf32, #tpu.memory_space<vmem>>, vector<1x128xf32>
    %32 = vector.broadcast %31 : vector<1x128xf32> to vector<8x128xf32>
    %33 = arith.mulf %30, %32 : vector<8x128xf32>
    %c0_14 = arith.constant 0 : index
    %c0_15 = arith.constant 0 : index
    %34 = vector.load %arg5[%c0_14, %c0_15] : memref<1x128xf32, #tpu.memory_space<vmem>>, vector<1x128xf32>
    %35 = vector.broadcast %34 : vector<1x128xf32> to vector<8x128xf32>
    %36 = arith.addf %33, %35 : vector<8x128xf32>
    %cst_16 = arith.constant 0.000000e+00 : f32
    %37 = vector.broadcast %cst_16 : f32 to vector<8x128xf32>
    %38 = arith.maximumf %36, %37 : vector<8x128xf32>
    %39 = arith.truncf %38 : vector<8x128xf32> to vector<8x128xbf16>
    %c0_17 = arith.constant 0 : index
    %c0_18 = arith.constant 0 : index
    %40 = vector.load %arg6[%c0_17, %c0_18] : memref<128x128xbf16, #tpu.memory_space<vmem>>, vector<128x128xbf16>
    %cst_19 = arith.constant dense<0.000000e+00> : vector<8x128xf32>
    %41 = tpu.matmul %39, %40, %cst_19 {dimension_numbers = #tpu.dot_dimension_numbers<[1], [0], [0], [1], [0, 0, 1, 1], [], []>} : vector<8x128xbf16>, vector<128x128xbf16>, vector<8x128xf32> -> vector<8x128xf32>
    %c0_20 = arith.constant 0 : index
    %c0_21 = arith.constant 0 : index
    %42 = vector.load %arg7[%c0_20, %c0_21] : memref<1x128xf32, #tpu.memory_space<vmem>>, vector<1x128xf32>
    %43 = vector.broadcast %42 : vector<1x128xf32> to vector<8x128xf32>
    %44 = arith.addf %41, %43 : vector<8x128xf32>
    %c0_22 = arith.constant 0 : index
    %c0_23 = arith.constant 0 : index
    %45 = vector.load %arg8[%c0_22, %c0_23] : memref<8x128xf32, #tpu.memory_space<vmem>>, vector<8x128xf32>
    tpu.vector_store %arg8[%c0_22, %c0_23], %44 {strides = array<i32>} : memref<8x128xf32, #tpu.memory_space<vmem>>, vector<8x128xf32>,
    return
  }
  func.func @transform_0(%arg0: i32) -> (i32, i32) {
    %c0_i32 = arith.constant 0 : i32
    %c0_i32_0 = arith.constant 0 : i32
    return %arg0, %c0_i32 : i32, i32
  }
  func.func @transform_1(%arg0: i32) -> (i32, i32) {
    %c0_i32 = arith.constant 0 : i32
    %c0_i32_0 = arith.constant 0 : i32
    %c0_i32_1 = arith.constant 0 : i32
    return %c0_i32, %c0_i32_0 : i32, i32
  }
  func.func @transform_2(%arg0: i32) -> (i32, i32) {
    %c0_i32 = arith.constant 0 : i32
    %c0_i32_0 = arith.constant 0 : i32
    %c0_i32_1 = arith.constant 0 : i32
    return %c0_i32, %c0_i32_0 : i32, i32
  }
  func.func @transform_3(%arg0: i32) -> (i32, i32) {
    %c0_i32 = arith.constant 0 : i32
    %c0_i32_0 = arith.constant 0 : i32
    %c0_i32_1 = arith.constant 0 : i32
    return %c0_i32, %c0_i32_0 : i32, i32
  }
  func.func @transform_4(%arg0: i32) -> (i32, i32) {
    %c0_i32 = arith.constant 0 : i32
    %c0_i32_0 = arith.constant 0 : i32
    %c0_i32_1 = arith.constant 0 : i32
    return %c0_i32, %c0_i32_0 : i32, i32
  }
  func.func @transform_5(%arg0: i32) -> (i32, i32) {
    %c0_i32 = arith.constant 0 : i32
    %c0_i32_0 = arith.constant 0 : i32
    %c0_i32_1 = arith.constant 0 : i32
    return %c0_i32, %c0_i32_0 : i32, i32
  }
  func.func @transform_6(%arg0: i32) -> (i32, i32) {
    %c0_i32 = arith.constant 0 : i32
    %c0_i32_0 = arith.constant 0 : i32
    %c0_i32_1 = arith.constant 0 : i32
    return %c0_i32, %c0_i32_0 : i32, i32
  }
  func.func @transform_7(%arg0: i32) -> (i32, i32) {
    %c0_i32 = arith.constant 0 : i32
    %c0_i32_0 = arith.constant 0 : i32
    return %arg0, %c0_i32 : i32, i32
  }
}

</mosaic_0001>

<llo_original>
// kernel: mlp_forward.1
$region0: #{mlp_forward.1}
  #allocation0 [shape = 'u32[]', space=smem, size = 0x4, offset = 0x4, fixed_abs, tag = 'smem constant byte address 0x4 - core index']
  #allocation1 [shape = 'u32[144,128]{1,0:T(1,128)}', space=vmem, size = 0x12000, scoped, tag = 'internal scratch']
  %s0 = inlined_call_operand.vmem [shape: f32[8,128], index: 0, kind: input, shape index: {}]
  %s1 = inlined_call_operand.vmem [shape: bf16[128,128], index: 1, kind: input, shape index: {}]
  %s2 = inlined_call_operand.vmem [shape: f32[1,128], index: 2, kind: input, shape index: {}]
  %s3 = inlined_call_operand.vmem [shape: f32[1,128], index: 3, kind: input, shape index: {}]
  %s4 = inlined_call_operand.vmem [shape: f32[1,128], index: 4, kind: input, shape index: {}]
  %s5 = inlined_call_operand.vmem [shape: bf16[128,128], index: 5, kind: input, shape index: {}]
  %s6 = inlined_call_operand.vmem [shape: f32[1,128], index: 6, kind: input, shape index: {}]
  %s7 = inlined_call_operand.hbm [shape: f32[8,128], index: 7, kind: output, shape index: {}]
  %s8 = sld [smem:[#allocation0]]
  $region38: #{mlp_forward.1} parent=0
    _
  %s10 = ssub.s32 1, %s8
  %s11 = scalar_select 0, %s10, %s8
  $region1: #{mlp_forward.1} parent=0
    #allocation2 [shape = 'u8[4096]{0}', space=vmem, size = 0x1000, scoped, tag = 'output window, operand 0, single buffered']
    #allocation3 [shape = 's32[1]{0}', space=sflag, size = 0x4, scoped, tag = 'scoped memory for mlp_forward.1']
    %12 = vsyncpa [#allocation3], 0
    // Predicated region
    $region2: #{mlp_forward.1} parent=1 // pred_check
      _
    $region3: #{mlp_forward.1} parent=1 // pred_check_branch
      %14 = sbr.rel (0) target = $region5
    $region4: #{mlp_forward.1} parent=1 // pred_region
      _
    $region5: #{mlp_forward.1} parent=1 // pred_fallthru
      _
    // Predicated region
    $region6: #{mlp_forward.1} parent=1 // pred_check
      _
    $region7: #{mlp_forward.1} parent=1 // pred_check_branch
      %16 = sbr.rel (0) target = $region9
    $region8: #{mlp_forward.1} parent=1 // pred_region
      _
    $region9: #{mlp_forward.1} parent=1 // pred_fallthru
      _
    // Predicated region
    $region10: #{mlp_forward.1} parent=1 // pred_check
      _
    $region11: #{mlp_forward.1} parent=1 // pred_check_branch
      %18 = sbr.rel (0) target = $region13
    $region12: #{mlp_forward.1} parent=1 // pred_region
      _
    $region13: #{mlp_forward.1} parent=1 // pred_fallthru
      _
    // Predicated region
    $region14: #{mlp_forward.1} parent=1 // pred_check
      _
    $region15: #{mlp_forward.1} parent=1 // pred_check_branch
      %20 = sbr.rel (0) target = $region17
    $region16: #{mlp_forward.1} parent=1 // pred_region
      _
    $region17: #{mlp_forward.1} parent=1 // pred_fallthru
      _
    // Predicated region
    $region18: #{mlp_forward.1} parent=1 // pred_check
      _
    $region19: #{mlp_forward.1} parent=1 // pred_check_branch
      %22 = sbr.rel (0) target = $region21
    $region20: #{mlp_forward.1} parent=1 // pred_region
      _
    $region21: #{mlp_forward.1} parent=1 // pred_fallthru
      _
    // Predicated region
    $region22: #{mlp_forward.1} parent=1 // pred_check
      _
    $region23: #{mlp_forward.1} parent=1 // pred_check_branch
      %24 = sbr.rel (0) target = $region25
    $region24: #{mlp_forward.1} parent=1 // pred_region
      _
    $region25: #{mlp_forward.1} parent=1 // pred_fallthru
      _
    // Predicated region
    $region26: #{mlp_forward.1} parent=1 // pred_check
      _
    $region27: #{mlp_forward.1} parent=1 // pred_check_branch
      %26 = sbr.rel (0) target = $region29
    $region28: #{mlp_forward.1} parent=1 // pred_region
      _
    $region29: #{mlp_forward.1} parent=1 // pred_fallthru
      _
    %v28 = vld [vmem:[%s0] sm:$0xff]
    %v29 = vpack.c.bf16 %v28, %v28
    %v30 = vld [vmem:[%s1] sm:$0xf]
    %v31 = vld [vmem:[%s1 + $0x4] sm:$0xf]
    %v32 = vld [vmem:[%s1 + $0x8] sm:$0xf]
    %v33 = vld [vmem:[%s1 + $0xc] sm:$0xf]
    %v34 = vld [vmem:[%s1 + $0x10] sm:$0xf]
    %v35 = vld [vmem:[%s1 + $0x14] sm:$0xf]
    %v36 = vld [vmem:[%s1 + $0x18] sm:$0xf]
    %v37 = vld [vmem:[%s1 + $0x1c] sm:$0xf]
    %v38 = vld [vmem:[%s1 + $0x20] sm:$0xf]
    %v39 = vld [vmem:[%s1 + $0x24] sm:$0xf]
    %v40 = vld [vmem:[%s1 + $0x28] sm:$0xf]
    %v41 = vld [vmem:[%s1 + $0x2c] sm:$0xf]
    %v42 = vld [vmem:[%s1 + $0x30] sm:$0xf]
    %v43 = vld [vmem:[%s1 + $0x34] sm:$0xf]
    %v44 = vld [vmem:[%s1 + $0x38] sm:$0xf]
    %v45 = vld [vmem:[%s1 + $0x3c] sm:$0xf]
    %v46 = vld [vmem:[%s2] sm:$0x1]
    %v48 = vlaneseq
    %v49 = vshrl.u32 %v48, 7
    %v50 = vsub.s32 0, %v49
    %v51 = vrot.slane %v46, %v50
    %v69 = vunpack.c.l.b16 %v30
    %v70 = vunpack.c.l.b16 %v31
    %v71 = vunpack.c.l.b16 %v32
    %v72 = vunpack.c.l.b16 %v33
    %v73 = vunpack.c.l.b16 %v34
    %v74 = vunpack.c.l.b16 %v35
    %v75 = vunpack.c.l.b16 %v36
    %v76 = vunpack.c.l.b16 %v37
    %v77 = vunpack.c.l.b16 %v38
    %v78 = vunpack.c.l.b16 %v39
    %v79 = vunpack.c.l.b16 %v40
    %v80 = vunpack.c.l.b16 %v41
    %v81 = vunpack.c.l.b16 %v42
    %v82 = vunpack.c.l.b16 %v43
    %v83 = vunpack.c.l.b16 %v44
    %v84 = vunpack.c.l.b16 %v45
    %v85 = vpack.c.b16 %v70, %v69
    %v86 = vpack.c.b16 %v72, %v71
    %v87 = vpack.c.b16 %v74, %v73
    %v88 = vpack.c.b16 %v76, %v75
    %v89 = vpack.c.b16 %v78, %v77
    %v90 = vpack.c.b16 %v80, %v79
    %v91 = vpack.c.b16 %v82, %v81
    %v92 = vpack.c.b16 %v84, %v83
    %101 = vmatprep.subr.bf16.mxu0 0
    %102 = vmatpush1.bf16.msra.mxu0 %v85
    %103 = vmatprep.subr.bf16.mxu0 0
    %104 = vmatpush1.bf16.msra.mxu0 %v86
    %105 = vmatprep.subr.bf16.mxu0 0
    %106 = vmatpush1.bf16.msra.mxu0 %v87
    %107 = vmatprep.subr.bf16.mxu0 0
    %108 = vmatpush1.bf16.msra.mxu0 %v88
    %109 = vmatprep.subr.bf16.mxu0 0
    %110 = vmatpush1.bf16.msra.mxu0 %v89
    %111 = vmatprep.subr.bf16.mxu0 0
    %112 = vmatpush1.bf16.msra.mxu0 %v90
    %113 = vmatprep.subr.bf16.mxu0 0
    %114 = vmatpush1.bf16.msra.mxu0 %v91
    %115 = vmatprep.subr.bf16.mxu0 0
    %116 = vmatpush1.bf16.msra.mxu0 %v92
    %117 = vmatprep.subr.bf16.mxu0 0
    %118 = vmatpush1.bf16.msra.mxu0 0
    %119 = vmatprep.subr.bf16.mxu0 0
    %120 = vmatpush1.bf16.msra.mxu0 0
    %121 = vmatprep.subr.bf16.mxu0 0
    %122 = vmatpush1.bf16.msra.mxu0 0
    %123 = vmatprep.subr.bf16.mxu0 0
    %124 = vmatpush1.bf16.msra.mxu0 0
    %125 = vmatprep.subr.bf16.mxu0 0
    %126 = vmatpush1.bf16.msra.mxu0 0
    %127 = vmatprep.subr.bf16.mxu0 0
    %128 = vmatpush1.bf16.msra.mxu0 0
    %129 = vmatprep.subr.bf16.mxu0 0
    %130 = vmatpush1.bf16.msra.mxu0 0
    %131 = vmatprep.subr.bf16.mxu0 0
    %132 = vmatpush1.bf16.msra.mxu0 0
    %133 = vmatprep.mubr.bf16.mxu0 0
    %134 = vmatmul.mubr.bf16.gmra.mrb[0].mxu0 %v29
    %v135 = vpop.f32.mrb[0].mxu0
    %v136 = vadd.f32 %v51, %v135
    %v137 = vpop.f32.mrb[0].mxu0
    %v138 = vpop.f32.mrb[0].mxu0
    %v139 = vpop.f32.mrb[0].mxu0
    %140 = vdwg.mxu0
    %141 = vadd.xlane.f32.xlu0 %v136
    %v142 = vpop.xlane.xlu0 %141
    %v143 = vmul.f32 %v142, 0.03125
    %v144 = vsub.f32 %v136, %v143
    %v145 = vlaneseq
    %v146 = vand.u32 %v145, 127
    %vm147 = vcmp.lt.s32.totalorder %v146, 32
    %v148 = vsel %vm147, 1.0, 0.0
    %v149 = vmul.f32 %v144, %v148
    %v150 = vmul.f32 %v149, %v149
    %151 = vadd.xlane.f32.xlu0 %v150
    %v152 = vpop.xlane.xlu0 %151
    %v153 = vmul.f32 %v152, 0.03125
    %v154 = vadd.f32 %v153, 1e-05
    %v155 = vrsqrt.pop %v154
    %v156 = vmul.f32 %v149, %v155
    %v157 = vld [vmem:[%s3] sm:$0x1]
    %v159 = vlaneseq
    %v160 = vshrl.u32 %v159, 7
    %v161 = vsub.s32 0, %v160
    %v162 = vrot.slane %v157, %v161
    %v164 = vmul.f32 %v156, %v162
    %v165 = vld [vmem:[%s4] sm:$0x1]
    %v167 = vlaneseq
    %v168 = vshrl.u32 %v167, 7
    %v169 = vsub.s32 0, %v168
    %v170 = vrot.slane %v165, %v169
    %v172 = vadd.f32 %v164, %v170
    %v173 = vmax.f32 %v172, 0.0
    %v174 = vpack.c.bf16 %v173, %v173
    %v175 = vld [vmem:[%s5] sm:$0xf]
    %v176 = vld [vmem:[%s5 + $0x4] sm:$0xf]
    %v177 = vld [vmem:[%s5 + $0x8] sm:$0xf]
    %v178 = vld [vmem:[%s5 + $0xc] sm:$0xf]
    %v179 = vld [vmem:[%s5 + $0x10] sm:$0xf]
    %v180 = vld [vmem:[%s5 + $0x14] sm:$0xf]
    %v181 = vld [vmem:[%s5 + $0x18] sm:$0xf]
    %v182 = vld [vmem:[%s5 + $0x1c] sm:$0xf]
    %v183 = vld [vmem:[%s5 + $0x20] sm:$0xf]
    %v184 = vld [vmem:[%s5 + $0x24] sm:$0xf]
    %v185 = vld [vmem:[%s5 + $0x28] sm:$0xf]
    %v186 = vld [vmem:[%s5 + $0x2c] sm:$0xf]
    %v187 = vld [vmem:[%s5 + $0x30] sm:$0xf]
    %v188 = vld [vmem:[%s5 + $0x34] sm:$0xf]
    %v189 = vld [vmem:[%s5 + $0x38] sm:$0xf]
    %v190 = vld [vmem:[%s5 + $0x3c] sm:$0xf]
    %v191 = vld [vmem:[%s6] sm:$0x1]
    %v193 = vlaneseq
    %v194 = vshrl.u32 %v193, 7
    %v195 = vsub.s32 0, %v194
    %v196 = vrot.slane %v191, %v195
    %v214 = vunpack.c.l.b16 %v175
    %v215 = vunpack.c.l.b16 %v176
    %v216 = vunpack.c.l.b16 %v177
    %v217 = vunpack.c.l.b16 %v178
    %v218 = vunpack.c.l.b16 %v179
    %v219 = vunpack.c.l.b16 %v180
    %v220 = vunpack.c.l.b16 %v181
    %v221 = vunpack.c.l.b16 %v182
    %v222 = vunpack.c.l.b16 %v183
    %v223 = vunpack.c.l.b16 %v184
    %v224 = vunpack.c.l.b16 %v185
    %v225 = vunpack.c.l.b16 %v186
    %v226 = vunpack.c.l.b16 %v187
    %v227 = vunpack.c.l.b16 %v188
    %v228 = vunpack.c.l.b16 %v189
    %v229 = vunpack.c.l.b16 %v190
    %v230 = vpack.c.b16 %v215, %v214
    %v231 = vpack.c.b16 %v217, %v216
    %v232 = vpack.c.b16 %v219, %v218
    %v233 = vpack.c.b16 %v221, %v220
    %v234 = vpack.c.b16 %v223, %v222
    %v235 = vpack.c.b16 %v225, %v224
    %v236 = vpack.c.b16 %v227, %v226
    %v237 = vpack.c.b16 %v229, %v228
    %246 = vmatprep.subr.bf16.mxu0 0
    %247 = vmatpush1.bf16.msra.mxu0 %v230
    %248 = vmatprep.subr.bf16.mxu0 0
    %249 = vmatpush1.bf16.msra.mxu0 %v231
    %250 = vmatprep.subr.bf16.mxu0 0
    %251 = vmatpush1.bf16.msra.mxu0 %v232
    %252 = vmatprep.subr.bf16.mxu0 0
    %253 = vmatpush1.bf16.msra.mxu0 %v233
    %254 = vmatprep.subr.bf16.mxu0 0
    %255 = vmatpush1.bf16.msra.mxu0 %v234
    %256 = vmatprep.subr.bf16.mxu0 0
    %257 = vmatpush1.bf16.msra.mxu0 %v235
    %258 = vmatprep.subr.bf16.mxu0 0
    %259 = vmatpush1.bf16.msra.mxu0 %v236
    %260 = vmatprep.subr.bf16.mxu0 0
    %261 = vmatpush1.bf16.msra.mxu0 %v237
    %262 = vmatprep.subr.bf16.mxu0 0
    %263 = vmatpush1.bf16.msra.mxu0 0
    %264 = vmatprep.subr.bf16.mxu0 0
    %265 = vmatpush1.bf16.msra.mxu0 0
    %266 = vmatprep.subr.bf16.mxu0 0
    %267 = vmatpush1.bf16.msra.mxu0 0
    %268 = vmatprep.subr.bf16.mxu0 0
    %269 = vmatpush1.bf16.msra.mxu0 0
    %270 = vmatprep.subr.bf16.mxu0 0
    %271 = vmatpush1.bf16.msra.mxu0 0
    %272 = vmatprep.subr.bf16.mxu0 0
    %273 = vmatpush1.bf16.msra.mxu0 0
    %274 = vmatprep.subr.bf16.mxu0 0
    %275 = vmatpush1.bf16.msra.mxu0 0
    %276 = vmatprep.subr.bf16.mxu0 0
    %277 = vmatpush1.bf16.msra.mxu0 0
    %278 = vmatprep.mubr.bf16.mxu0 0
    %279 = vmatmul.mubr.bf16.gmra.mrb[0].mxu0 %v174
    %v280 = vpop.f32.mrb[0].mxu0
    %v281 = vadd.f32 %v196, %v280
    %v282 = vpop.f32.mrb[0].mxu0
    %v283 = vpop.f32.mrb[0].mxu0
    %v284 = vpop.f32.mrb[0].mxu0
    %285 = vdwg.mxu0
    %286 = vst [vmem:[#allocation2] sm:$0xff] %v281
    // Predicated region
    $region30: #{mlp_forward.1} parent=1 // pred_check
      _
    $region31: #{mlp_forward.1} parent=1 // pred_check_branch
      %288 = sbr.rel (0) target = $region33
    $region32: #{mlp_forward.1} parent=1 // pred_region
      %s290 = ssub.s32 128, 128
      %291 = vsyncadd [#allocation3], %s290
      %s293 = sshll.u32 [#allocation2], 4
      %s294 = int_to_ptr.vmem [resolvable:$true] %s293
      %296 = dma.vmem_to_hbm [thread:$0]  %s294, 128, %s7, [#allocation3]
    $region33: #{mlp_forward.1} parent=1 // pred_fallthru
      _
    // Predicated region
    $region34: #{mlp_forward.1} parent=1 // pred_check
      _
    $region35: #{mlp_forward.1} parent=1 // pred_check_branch
      %298 = sbr.rel (0) target = $region37
    $region36: #{mlp_forward.1} parent=1 // pred_region
      %299 = dma.done [#allocation3], 128
    $region37: #{mlp_forward.1} parent=1 // pred_fallthru
      _
    %300 = vsyncpa [#allocation3], 1

</llo_original>
